<compile_context>
chip_gen: v6e
topology: v6e:2x2x1
jax: 0.10.0
libtpu: 0.0.40
codegen_flags: <defaults>
</compile_context>

<pallas_src>
import jax
import jax.numpy as jnp
from jax import lax
from jax.experimental import pallas as pl
from jax.experimental.pallas import tpu as pltpu

LABEL_SMOOTHING = 0.1


def _ce_loss_kernel(pred_ref, tgt_ref, mask_ref, lsum_ref, msum_ref):
    x = pred_ref[...].astype(jnp.float32)          # (TM, C)  upcast in-kernel
    tgt = tgt_ref[...]                             # (TM, 1)  int32
    m = mask_ref[...].astype(jnp.float32)          # (TM, 1)
    C = x.shape[-1]
    eps = LABEL_SMOOTHING

    # stable log-sum-exp over classes
    xmax = jnp.max(x, axis=-1, keepdims=True)                            # (TM, 1)
    lse = jnp.log(jnp.sum(jnp.exp(x - xmax), axis=-1, keepdims=True)) + xmax

    # fused gather + class-sum:  w_c = eps/C + (1-eps)*1[c == target]
    iota = lax.broadcasted_iota(jnp.int32, x.shape, 1)                   # (TM, C)
    w = (eps / C) + (1.0 - eps) * (iota == tgt).astype(jnp.float32)
    wx = jnp.sum(w * x, axis=-1, keepdims=True)                          # (TM, 1)

    loss = lse - wx                                                      # (TM, 1)

    # per-block partial sums (reduced across the grid in the wrapper)
    lsum_ref[...] = jnp.sum(loss * m, keepdims=True).reshape(1, 1, 1)
    msum_ref[...] = jnp.sum(m, keepdims=True).reshape(1, 1, 1)


def ce_loss_pallas(pred, target, mask, *, pred_tile_bytes=2 << 20):
    """pred: (N, C) float (any dtype), target: (N,) int, mask: (N,) float -> scalar."""
    N, C = pred.shape
    itemsize = jnp.dtype(pred.dtype).itemsize
    pack = {4: 8, 2: 16, 1: 32}.get(itemsize, 8)   # sublane packing per dtype

    # Row-tile sized against a ~2 MiB pred block, multiple of the sublane pack,
    # capped so tiny problems become a single block.
    n_pad_to_pack = -(-N // pack) * pack
    tile_rows = max(pack, (pred_tile_bytes // (C * itemsize)) // pack * pack)
    tile_rows = min(tile_rows, 2048, n_pad_to_pack)

    g = -(-N // tile_rows)          # number of row blocks
    Np = g * tile_rows

    tgt2d = target.astype(jnp.int32).reshape(N, 1)
    mask2d = mask.astype(jnp.float32).reshape(N, 1)
    if Np != N:
        # Ragged tail: pad with mask=0 rows (contribute nothing to either sum).
        pad = Np - N
        pred = jnp.pad(pred, ((0, pad), (0, 0)))
        tgt2d = jnp.pad(tgt2d, ((0, pad), (0, 0)))
        mask2d = jnp.pad(mask2d, ((0, pad), (0, 0)))

    # VMEM budget: double-buffered pred tile + tiny tgt/mask tiles + headroom.
    vmem_need = 2 * (tile_rows * C * itemsize + 2 * tile_rows * 4) + (1 << 20)
    vmem_limit = int(min(48 << 20, max(16 << 20, vmem_need)))

    lsum, msum = pl.pallas_call(
        _ce_loss_kernel,
        out_shape=(
            jax.ShapeDtypeStruct((g, 1, 1), jnp.float32),
            jax.ShapeDtypeStruct((g, 1, 1), jnp.float32),
        ),
        grid_spec=pltpu.PrefetchScalarGridSpec(
            num_scalar_prefetch=0,
            grid=(g,),
            in_specs=[
                pl.BlockSpec((tile_rows, C), lambda i: (i, 0)),
                pl.BlockSpec((tile_rows, 1), lambda i: (i, 0)),
                pl.BlockSpec((tile_rows, 1), lambda i: (i, 0)),
            ],
            out_specs=(
                pl.BlockSpec((1, 1, 1), lambda i: (i, 0, 0)),
                pl.BlockSpec((1, 1, 1), lambda i: (i, 0, 0)),
            ),
        ),
        compiler_params=pltpu.CompilerParams(
            dimension_semantics=("parallel",),
            vmem_limit_bytes=vmem_limit,
        ),
    )(pred, tgt2d, mask2d)

    return jnp.sum(lsum) / jnp.sum(msum)


def ce_loss_ref(pred, target, mask):
    """Pure-JAX reference matching torch CrossEntropyLoss(label_smoothing=0.1,
    reduction='none') followed by masked mean."""
    eps = LABEL_SMOOTHING
    logp = jax.nn.log_softmax(pred.astype(jnp.float32), axis=-1)
    nll = -jnp.take_along_axis(logp, target[:, None].astype(jnp.int32), axis=-1)[:, 0]
    smooth = -jnp.mean(logp, axis=-1)
    loss = (1.0 - eps) * nll + eps * smooth
    m = mask.astype(jnp.float32)
    return jnp.sum(loss * m) / jnp.sum(m)


if __name__ == "__main__":
    key = jax.random.PRNGKey(0)

    # Case 1: small f32 problem (single block).
    k1, k2, k3 = jax.random.split(key, 3)
    N, C = 16, 64
    pred = jax.random.normal(k1, (N, C), dtype=jnp.float32)
    target = jax.random.randint(k2, (N,), 0, C, dtype=jnp.int32)
    mask = (jax.random.uniform(k3, (N,)) > 0.3).astype(jnp.float32)
    mask = mask.at[0].set(1.0)  # ensure mask.sum() > 0

    out = ce_loss_pallas(pred, target, mask)
    jax.block_until_ready(out)
    ref = ce_loss_ref(pred, target, mask)
    assert jnp.allclose(out, ref, rtol=1e-5, atol=1e-5), (out, ref)

    # Case 2: bf16 logits, ragged N (exercises native-dtype path + mask-0 padding).
    k4, k5, k6 = jax.random.split(jax.random.PRNGKey(1), 3)
    N2, C2 = 300, 128
    pred2 = jax.random.normal(k4, (N2, C2), dtype=jnp.bfloat16)
    target2 = jax.random.randint(k5, (N2,), 0, C2, dtype=jnp.int32)
    mask2 = (jax.random.uniform(k6, (N2,)) > 0.3).astype(jnp.float32)
    mask2 = mask2.at[0].set(1.0)

    out2 = ce_loss_pallas(pred2, target2, mask2)
    jax.block_until_ready(out2)
    ref2 = ce_loss_ref(pred2, target2, mask2)
    assert jnp.allclose(out2, ref2, rtol=1e-4, atol=1e-4), (out2, ref2)

    print("KERNEL_OK")
</pallas_src>

<mosaic_0001>
module attributes {stable_mosaic.version = 11 : i64} {
  func.func @_ce_loss_kernel(%arg0: i32, %arg1: memref<16x64xf32, #tpu.memory_space<vmem>>, %arg2: memref<16x1xi32, #tpu.memory_space<vmem>>, %arg3: memref<16x1xf32, #tpu.memory_space<vmem>>, %arg4: memref<1x1x1xf32, #tpu.memory_space<vmem>>, %arg5: memref<1x1x1xf32, #tpu.memory_space<vmem>>) attributes {dimension_semantics = [#tpu.dimension_semantics<parallel>], iteration_bounds = array<i64: 1>, scalar_prefetch = 0 : i64, scratch_operands = 0 : i64, tpu.core_type = #tpu.core_type<tc>, window_params = [{transform_indices = @transform_0, window_bounds = array<i64: 16, 64>}, {transform_indices = @transform_1, window_bounds = array<i64: 16, 1>}, {transform_indices = @transform_2, window_bounds = array<i64: 16, 1>}, {transform_indices = @transform_3, window_bounds = array<i64: 1, 1, 1>}, {transform_indices = @transform_4, window_bounds = array<i64: 1, 1, 1>}]} {
    %c0 = arith.constant 0 : index
    %c0_0 = arith.constant 0 : index
    %0 = vector.load %arg1[%c0, %c0_0] : memref<16x64xf32, #tpu.memory_space<vmem>>, vector<16x64xf32>
    %c0_1 = arith.constant 0 : index
    %c0_2 = arith.constant 0 : index
    %1 = vector.load %arg2[%c0_1, %c0_2] : memref<16x1xi32, #tpu.memory_space<vmem>>, vector<16x1xi32>
    %c0_3 = arith.constant 0 : index
    %c0_4 = arith.constant 0 : index
    %2 = vector.load %arg3[%c0_3, %c0_4] : memref<16x1xf32, #tpu.memory_space<vmem>>, vector<16x1xf32>
    %cst = arith.constant dense<0xFF800000> : vector<16xf32>
    %3 = vector.multi_reduction <maximumf>, %0, %cst [1] : vector<16x64xf32> to vector<16xf32>
    %4 = vector.shape_cast %3 : vector<16xf32> to vector<16x1xf32>
    %5 = vector.broadcast %4 : vector<16x1xf32> to vector<16x64xf32>
    %6 = arith.subf %0, %5 : vector<16x64xf32>
    %7 = math.exp %6 : vector<16x64xf32>
    %cst_5 = arith.constant dense<0.000000e+00> : vector<16xf32>
    %8 = vector.multi_reduction <add>, %7, %cst_5 [1] : vector<16x64xf32> to vector<16xf32>
    %9 = vector.shape_cast %8 : vector<16xf32> to vector<16x1xf32>
    %10 = math.log %9 : vector<16x1xf32>
    %11 = arith.addf %10, %4 : vector<16x1xf32>
    %12 = tpu.iota {dimensions = array<i32: 1>} : vector<16x64xi32>
    %13 = vector.broadcast %1 : vector<16x1xi32> to vector<16x64xi32>
    %14 = arith.cmpi eq, %12, %13 : vector<16x64xi32>
    %15 = arith.extui %14 : vector<16x64xi1> to vector<16x64xi32>
    %16 = arith.sitofp %15 : vector<16x64xi32> to vector<16x64xf32>
    %cst_6 = arith.constant 0.899999976 : f32
    %17 = vector.broadcast %cst_6 : f32 to vector<16x64xf32>
    %18 = arith.mulf %17, %16 : vector<16x64xf32>
    %cst_7 = arith.constant 1.562500e-03 : f32
    %19 = vector.broadcast %cst_7 : f32 to vector<16x64xf32>
    %20 = arith.addf %19, %18 : vector<16x64xf32>
    %21 = arith.mulf %20, %0 : vector<16x64xf32>
    %cst_8 = arith.constant dense<0.000000e+00> : vector<16xf32>
    %22 = vector.multi_reduction <add>, %21, %cst_8 [1] : vector<16x64xf32> to vector<16xf32>
    %23 = vector.shape_cast %22 : vector<16xf32> to vector<16x1xf32>
    %24 = arith.subf %11, %23 : vector<16x1xf32>
    %25 = arith.mulf %24, %2 : vector<16x1xf32>
    %26 = vector.shape_cast %25 : vector<16x1xf32> to vector<1x16x1xf32>
    %cst_9 = arith.constant dense<0.000000e+00> : vector<1xf32>
    %27 = vector.multi_reduction <add>, %26, %cst_9 [1, 2] : vector<1x16x1xf32> to vector<1xf32>
    %28 = vector.shape_cast %27 : vector<1xf32> to vector<1x1x1xf32>
    %29 = vector.extract %28[0, 0, 0] : f32 from vector<1x1x1xf32>
    %30 = vector.broadcast %29 : f32 to vector<1x1xf32>
    %31 = vector.shape_cast %30 : vector<1x1xf32> to vector<1x1x1xf32>
    %c0_10 = arith.constant 0 : index
    %c0_11 = arith.constant 0 : index
    %c0_12 = arith.constant 0 : index
    %32 = vector.load %arg4[%c0_10, %c0_11, %c0_12] : memref<1x1x1xf32, #tpu.memory_space<vmem>>, vector<1x1x1xf32>
    tpu.vector_store %arg4[%c0_10, %c0_11, %c0_12], %31 {strides = array<i32>} : memref<1x1x1xf32, #tpu.memory_space<vmem>>, vector<1x1x1xf32>,
    %33 = vector.shape_cast %2 : vector<16x1xf32> to vector<1x16x1xf32>
    %cst_13 = arith.constant dense<0.000000e+00> : vector<1xf32>
    %34 = vector.multi_reduction <add>, %33, %cst_13 [1, 2] : vector<1x16x1xf32> to vector<1xf32>
    %35 = vector.shape_cast %34 : vector<1xf32> to vector<1x1x1xf32>
    %36 = vector.extract %35[0, 0, 0] : f32 from vector<1x1x1xf32>
    %37 = vector.broadcast %36 : f32 to vector<1x1xf32>
    %38 = vector.shape_cast %37 : vector<1x1xf32> to vector<1x1x1xf32>
    %c0_14 = arith.constant 0 : index
    %c0_15 = arith.constant 0 : index
    %c0_16 = arith.constant 0 : index
    %39 = vector.load %arg5[%c0_14, %c0_15, %c0_16] : memref<1x1x1xf32, #tpu.memory_space<vmem>>, vector<1x1x1xf32>
    tpu.vector_store %arg5[%c0_14, %c0_15, %c0_16], %38 {strides = array<i32>} : memref<1x1x1xf32, #tpu.memory_space<vmem>>, vector<1x1x1xf32>,
    return
  }
  func.func @transform_0(%arg0: i32) -> (i32, i32) {
    %c0_i32 = arith.constant 0 : i32
    %c0_i32_0 = arith.constant 0 : i32
    return %arg0, %c0_i32 : i32, i32
  }
  func.func @transform_1(%arg0: i32) -> (i32, i32) {
    %c0_i32 = arith.constant 0 : i32
    %c0_i32_0 = arith.constant 0 : i32
    return %arg0, %c0_i32 : i32, i32
  }
  func.func @transform_2(%arg0: i32) -> (i32, i32) {
    %c0_i32 = arith.constant 0 : i32
    %c0_i32_0 = arith.constant 0 : i32
    return %arg0, %c0_i32 : i32, i32
  }
  func.func @transform_3(%arg0: i32) -> (i32, i32, i32) {
    %c0_i32 = arith.constant 0 : i32
    %c0_i32_0 = arith.constant 0 : i32
    %c0_i32_1 = arith.constant 0 : i32
    return %arg0, %c0_i32, %c0_i32_0 : i32, i32, i32
  }
  func.func @transform_4(%arg0: i32) -> (i32, i32, i32) {
    %c0_i32 = arith.constant 0 : i32
    %c0_i32_0 = arith.constant 0 : i32
    %c0_i32_1 = arith.constant 0 : i32
    return %arg0, %c0_i32, %c0_i32_0 : i32, i32, i32
  }
}

</mosaic_0001>

<llo_original>
// kernel: tpu_custom_call.1
$region0: #{tpu_custom_call.1}
  #allocation0 [shape = 'u32[]', space=smem, size = 0x4, offset = 0x4, fixed_abs, tag = 'smem constant byte address 0x4 - core index']
  #allocation1 [shape = 'u32[144,128]{1,0:T(1,128)}', space=vmem, size = 0x12000, scoped, tag = 'internal scratch']
  %s0 = inlined_call_operand.vmem [shape: f32[16,64], index: 0, kind: input, shape index: {}]
  %s1 = inlined_call_operand.vmem [shape: s32[16,1], index: 1, kind: input, shape index: {}]
  %s2 = inlined_call_operand.vmem [shape: f32[16,1], index: 2, kind: input, shape index: {}]
  %s3 = inlined_call_operand.hbm [shape: f32[1,1,1], index: 3, kind: output, shape index: {0}]
  %s4 = inlined_call_operand.hbm [shape: f32[1,1,1], index: 4, kind: output, shape index: {1}]
  %5 = xla_tuple %s3, %s4
  %s6 = sld [smem:[#allocation0]]
  $region30: #{tpu_custom_call.1} parent=0
    _
  %s8 = ssub.s32 1, %s6
  %s9 = scalar_select 0, %s8, %s6
  $region1: #{tpu_custom_call.1} parent=0
    #allocation2 [shape = 'u8[512]{0}', space=vmem, size = 0x400, scoped, tag = 'output window, operand 0, single buffered']
    #allocation3 [shape = 's32[1]{0}', space=sflag, size = 0x4, scoped, tag = 'scoped memory for tpu_custom_call.1']
    #allocation4 [shape = 'u8[512]{0}', space=vmem, size = 0x400, scoped, tag = 'output window, operand 1, single buffered']
    #allocation5 [shape = 's32[1]{0}', space=sflag, size = 0x4, scoped, tag = 'scoped memory for tpu_custom_call.1']
    %10 = vsyncpa [#allocation3], 0
    %11 = vsyncpa [#allocation5], 0
    // Predicated region
    $region2: #{tpu_custom_call.1} parent=1 // pred_check
      _
    $region3: #{tpu_custom_call.1} parent=1 // pred_check_branch
      %13 = sbr.rel (0) target = $region5
    $region4: #{tpu_custom_call.1} parent=1 // pred_region
      _
    $region5: #{tpu_custom_call.1} parent=1 // pred_fallthru
      _
    // Predicated region
    $region6: #{tpu_custom_call.1} parent=1 // pred_check
      _
    $region7: #{tpu_custom_call.1} parent=1 // pred_check_branch
      %15 = sbr.rel (0) target = $region9
    $region8: #{tpu_custom_call.1} parent=1 // pred_region
      _
    $region9: #{tpu_custom_call.1} parent=1 // pred_fallthru
      _
    // Predicated region
    $region10: #{tpu_custom_call.1} parent=1 // pred_check
      _
    $region11: #{tpu_custom_call.1} parent=1 // pred_check_branch
      %17 = sbr.rel (0) target = $region13
    $region12: #{tpu_custom_call.1} parent=1 // pred_region
      _
    $region13: #{tpu_custom_call.1} parent=1 // pred_fallthru
      _
    %v18 = vld [vmem:[%s0] sm:$0xff]
    %v19 = vld [vmem:[%s0 + $0x8] sm:$0xff]
    %v20 = vld [vmem:[%s1] sm:$0xff]
    %v21 = vld [vmem:[%s1 + $0x8] sm:$0xff]
    %v22 = vld [vmem:[%s2] sm:$0xff]
    %v23 = vld [vmem:[%s2 + $0x8] sm:$0xff]
    %vm24 = vcmask 523264
    %v25 = vsel %vm24, %v18, -inf
    %26 = vmax.xlane.f32.xlu0 %v25
    %v27 = vpop.xlane.xlu0 %26
    %v28 = vsel %vm24, %v19, -inf
    %29 = vmax.xlane.f32.xlu0 %v28
    %v30 = vpop.xlane.xlu0 %29
    %v31 = vsub.f32 %v18, %v27
    %v32 = vsub.f32 %v19, %v30
    %v33 = vmul.f32 %v31, 1.442695
    %v34 = vpow.pop %v33
    %v35 = vmul.f32 %v32, 1.442695
    %v36 = vpow.pop %v35
    %v37 = vsel %vm24, %v34, 0.0
    %38 = vadd.xlane.f32.xlu0 %v37
    %v39 = vpop.xlane.xlu0 %38
    %v40 = vsel %vm24, %v36, 0.0
    %41 = vadd.xlane.f32.xlu0 %v40
    %v42 = vpop.xlane.xlu0 %41
    %v43 = vlog2.pop %v39
    %v44 = vmul.f32 %v43, 0.6931472
    %v45 = vlog2.pop %v42
    %v46 = vmul.f32 %v45, 0.6931472
    %v47 = vadd.f32 %v44, %v27
    %v48 = vadd.f32 %v46, %v30
    %v49 = vlaneseq
    %v50 = vand.u32 %v49, 127
    %51 = vset.pattern.permute.xlu0 0
    %52 = vperm.xlu0 %51, %v20
    %v53 = vpop.permute.xlu0 %52
    %54 = vset.pattern.permute.xlu0 0
    %55 = vperm.xlu0 %54, %v21
    %v56 = vpop.permute.xlu0 %55
    %vm57 = vcmp.eq.s32.totalorder %v50, %v53
    %vm58 = vcmp.eq.s32.totalorder %v50, %v56
    %v59 = vsel %vm57, 1, 0
    %v60 = vsel %vm58, 1, 0
    %v61 = vcvt.s32.f32 %v59
    %v62 = vcvt.s32.f32 %v60
    %v63 = vmul.f32 %v61, 0.9
    %v64 = vmul.f32 %v62, 0.9
    %v65 = vadd.f32 %v63, 0.0015625
    %v66 = vadd.f32 %v64, 0.0015625
    %v67 = vmul.f32 %v65, %v18
    %v68 = vmul.f32 %v66, %v19
    %v69 = vsel %vm24, %v67, 0.0
    %70 = vadd.xlane.f32.xlu0 %v69
    %v71 = vpop.xlane.xlu0 %70
    %v72 = vsel %vm24, %v68, 0.0
    %73 = vadd.xlane.f32.xlu0 %v72
    %v74 = vpop.xlane.xlu0 %73
    %v75 = vsub.f32 %v47, %v71
    %v76 = vsub.f32 %v48, %v74
    %v77 = vmul.f32 %v75, %v22
    %v78 = vmul.f32 %v76, %v23
    %vm79 = vcmask 7168
    %v80 = vsel %vm79, %v77, 0.0
    %v81 = vsel %vm79, %v78, 0.0
    %v82 = vadd.f32 %v80, %v81
    %83 = vadd.xlane.f32.xlu0 %v82
    %v84 = vpop.xlane.xlu0 %83
    %v85 = vrot.slane %v84, 4
    %v86 = vadd.f32 %v84, %v85
    %v87 = vrot.slane %v86, 2
    %v88 = vadd.f32 %v86, %v87
    %v89 = vrot.slane %v88, 1
    %v90 = vadd.f32 %v88, %v89
    %s91 = vtos %v90
    %v92 = vstv %s91
    %vm93 = vcmask 0
    %94 = vst.msk [vmem:[#allocation2] sm:$0x1] %vm93, %v92
    %v95 = vsel %vm79, %v22, 0.0
    %v96 = vsel %vm79, %v23, 0.0
    %v97 = vadd.f32 %v95, %v96
    %98 = vadd.xlane.f32.xlu0 %v97
    %v99 = vpop.xlane.xlu0 %98
    %v100 = vrot.slane %v99, 4
    %v101 = vadd.f32 %v99, %v100
    %v102 = vrot.slane %v101, 2
    %v103 = vadd.f32 %v101, %v102
    %v104 = vrot.slane %v103, 1
    %v105 = vadd.f32 %v103, %v104
    %s106 = vtos %v105
    %v107 = vstv %s106
    %108 = vst.msk [vmem:[#allocation4] sm:$0x1] %vm93, %v107
    // Predicated region
    $region14: #{tpu_custom_call.1} parent=1 // pred_check
      _
    $region15: #{tpu_custom_call.1} parent=1 // pred_check_branch
      %110 = sbr.rel (0) target = $region17
    $region16: #{tpu_custom_call.1} parent=1 // pred_region
      %s112 = ssub.s32 16, 16
      %113 = vsyncadd [#allocation3], %s112
      %s115 = sshll.u32 [#allocation2], 4
      %s116 = int_to_ptr.vmem [resolvable:$true] %s115
      %118 = dma.vmem_to_hbm [thread:$0]  %s116, 16, %s3, [#allocation3]
    $region17: #{tpu_custom_call.1} parent=1 // pred_fallthru
      _
    // Predicated region
    $region18: #{tpu_custom_call.1} parent=1 // pred_check
      _
    $region19: #{tpu_custom_call.1} parent=1 // pred_check_branch
      %120 = sbr.rel (0) target = $region21
    $region20: #{tpu_custom_call.1} parent=1 // pred_region
      %s122 = ssub.s32 16, 16
      %123 = vsyncadd [#allocation5], %s122
      %s125 = sshll.u32 [#allocation4], 4
      %s126 = int_to_ptr.vmem [resolvable:$true] %s125
      %128 = dma.vmem_to_hbm [thread:$0]  %s126, 16, %s4, [#allocation5]
    $region21: #{tpu_custom_call.1} parent=1 // pred_fallthru
      _
    // Predicated region
    $region22: #{tpu_custom_call.1} parent=1 // pred_check
      _
    $region23: #{tpu_custom_call.1} parent=1 // pred_check_branch
      %130 = sbr.rel (0) target = $region25
    $region24: #{tpu_custom_call.1} parent=1 // pred_region
      %131 = dma.done [#allocation3], 16
    $region25: #{tpu_custom_call.1} parent=1 // pred_fallthru
      _
    // Predicated region
    $region26: #{tpu_custom_call.1} parent=1 // pred_check
      _
    $region27: #{tpu_custom_call.1} parent=1 // pred_check_branch
      %133 = sbr.rel (0) target = $region29
    $region28: #{tpu_custom_call.1} parent=1 // pred_region
      %134 = dma.done [#allocation5], 16
    $region29: #{tpu_custom_call.1} parent=1 // pred_fallthru
      _
    %135 = vsyncpa [#allocation3], 1
    %136 = vsyncpa [#allocation5], 1

</llo_original>
